<compile_context>
chip_gen: v6e
topology: v6e:2x2x1
jax: 0.10.0
libtpu: 0.0.40
codegen_flags: <defaults>
</compile_context>

<pallas_src>
import functools
import math

import jax
import jax.numpy as jnp
from jax import lax
from jax.experimental import pallas as pl
from jax.experimental.pallas import tpu as pltpu


def _self_attention_kernel(x_ref, wqkv_ref, bqkv_ref, o_ref, *, hidden_dim):
    """One grid step == one batch element (whole sequence resident in VMEM)."""
    h = hidden_dim
    x = x_ref[...]                                        # (S, D_in), bf16

    # Fused QKV projection: one wide MXU pass, fp32 accumulation + bias.
    qkv = jnp.dot(x, wqkv_ref[...],
                  preferred_element_type=jnp.float32) + bqkv_ref[...]   # (S, 3H) f32
    q = qkv[:, :h].astype(x.dtype)        # 1/sqrt(H) already folded into Wq/bq
    k = qkv[:, h:2 * h].astype(x.dtype)
    v = qkv[:, 2 * h:].astype(x.dtype)

    # attention_scores = Q @ K^T : contract last dims of both operands so K is
    # fed as the transposed MXU operand directly (no XLU transpose / copy).
    scores = lax.dot_general(q, k, (((1,), (1,)), ((), ())),
                             preferred_element_type=jnp.float32)        # (S, S) f32

    # Numerically stable softmax, kept in fp32 (VPU max/sum, EUP exp + recip).
    scores = scores - jnp.max(scores, axis=-1, keepdims=True)
    p = jnp.exp(scores)
    p = p * pl.reciprocal(jnp.sum(p, axis=-1, keepdims=True), approx=True)

    # attention_output = P @ V  (bf16 operands, fp32 accumulation).
    out = jnp.dot(p.astype(x.dtype), v, preferred_element_type=jnp.float32)
    o_ref[...] = out.astype(o_ref.dtype)


def fuse_qkv_params(wq, wk, wv, bq, bk, bv, hidden_dim,
                    compute_dtype=jnp.bfloat16):
    """Concatenate Q/K/V params into (D_in, 3H) weight / (1, 3H) bias.

    The 1/sqrt(hidden_dim) attention scale is folded into the Q projection
    here (one-time "init" cost) so the kernel never rescales the (S, S) scores.
    """
    scale_inv = 1.0 / math.sqrt(float(hidden_dim))
    wqkv = jnp.concatenate([wq * scale_inv, wk, wv], axis=1).astype(compute_dtype)
    bqkv = jnp.concatenate([bq * scale_inv, bk, bv], axis=1).astype(jnp.float32)
    return wqkv, bqkv


def self_attention(x, wqkv, bqkv, hidden_dim, *, compute_dtype=jnp.bfloat16):
    """x: (B, S, D_in); wqkv: (D_in, 3H); bqkv: (1, 3H)  ->  (B, S, H) fp32."""
    B, S, D_in = x.shape
    H = hidden_dim
    x_c = x.astype(compute_dtype)

    kernel = functools.partial(_self_attention_kernel, hidden_dim=H)

    cost = pl.CostEstimate(
        flops=2 * B * S * D_in * (3 * H) + 4 * B * S * S * H,
        transcendentals=B * S * S,
        bytes_accessed=(x_c.size * x_c.dtype.itemsize
                        + wqkv.size * wqkv.dtype.itemsize
                        + bqkv.size * bqkv.dtype.itemsize
                        + B * S * H * 4),
    )

    # TODO(synk): for long sequences (S >~ 1-2K) switch to a flash-style
    # (query-block, kv-block) grid with online-softmax accumulators (and raise
    # vmem_limit_bytes) so the (S, S) fp32 score tile stays within scoped VMEM;
    # at these small shapes a whole-sequence tile per batch element is optimal.
    return pl.pallas_call(
        kernel,
        out_shape=jax.ShapeDtypeStruct((B, S, H), jnp.float32),
        grid_spec=pltpu.PrefetchScalarGridSpec(
            num_scalar_prefetch=0,
            grid=(B,),
            in_specs=[
                # Leading size-1 batch dim squeezed -> kernel sees rank-2 refs.
                pl.BlockSpec((None, S, D_in), lambda b: (b, 0, 0)),   # x tile
                pl.BlockSpec((D_in, 3 * H), lambda b: (0, 0)),        # fused Wqkv
                pl.BlockSpec((1, 3 * H), lambda b: (0, 0)),           # fused bias
            ],
            out_specs=pl.BlockSpec((None, S, H), lambda b: (b, 0, 0)),
        ),
        compiler_params=pltpu.CompilerParams(
            dimension_semantics=("parallel",)),   # batch axis shards across TCs
        cost_estimate=cost,
    )(x_c, wqkv, bqkv)


def _init_linear(key, in_dim, out_dim):
    # Mimics nn.Linear default init: U(-1/sqrt(in_dim), 1/sqrt(in_dim)).
    kw, kb = jax.random.split(key)
    bound = 1.0 / math.sqrt(in_dim)
    # Stored as (in_dim, out_dim) == W^T so the kernel does x @ W.
    w = jax.random.uniform(kw, (in_dim, out_dim), jnp.float32, -bound, bound)
    b = jax.random.uniform(kb, (1, out_dim), jnp.float32, -bound, bound)
    return w, b


def reference(x, wq, wk, wv, bq, bk, bv, hidden_dim):
    q = x @ wq + bq
    k = x @ wk + bk
    v = x @ wv + bv
    s = jnp.einsum("bqd,bkd->bqk", q, k) / math.sqrt(float(hidden_dim))
    p = jax.nn.softmax(s, axis=-1)
    return jnp.einsum("bqk,bkd->bqd", p, v)


if __name__ == "__main__":
    # NOTE: H = D_in = 32 (< 128 lanes) is layout-pathological on TPU; real
    # configs should use multiples of 128. Kept small to match the module spec.
    B, S, D_in, H = 2, 8, 32, 32

    key = jax.random.PRNGKey(0)
    kx, kq, kk, kv = jax.random.split(key, 4)

    x = jax.random.normal(kx, (B, S, D_in), jnp.float32)
    wq, bq = _init_linear(kq, D_in, H)
    wk, bk = _init_linear(kk, D_in, H)
    wv, bv = _init_linear(kv, D_in, H)

    wqkv, bqkv = fuse_qkv_params(wq, wk, wv, bq, bk, bv, H)

    out = self_attention(x, wqkv, bqkv, H)
    out = jax.block_until_ready(out)

    ref = reference(x, wq, wk, wv, bq, bk, bv, H)
    assert out.shape == (B, S, H)
    # bf16 MXU operands + approx EUP reciprocal -> looser tolerance vs fp32 ref.
    assert jnp.allclose(out, ref, atol=3e-2, rtol=3e-2), "mismatch vs JAX reference"

    print("KERNEL_OK")
</pallas_src>

<mosaic_0001>
module attributes {stable_mosaic.version = 11 : i64} {
  func.func @_self_attention_kernel(%arg0: i32, %arg1: memref<1x8x32xbf16, #tpu.memory_space<vmem>>, %arg2: memref<32x96xbf16, #tpu.memory_space<vmem>>, %arg3: memref<1x96xf32, #tpu.memory_space<vmem>>, %arg4: memref<1x8x32xf32, #tpu.memory_space<vmem>>) attributes {dimension_semantics = [#tpu.dimension_semantics<parallel>], iteration_bounds = array<i64: 2>, scalar_prefetch = 0 : i64, scratch_operands = 0 : i64, tpu.core_type = #tpu.core_type<tc>, window_params = [{transform_indices = @transform_0, window_bounds = array<i64: 1, 8, 32>}, {pipeline_mode = #tpu.pipeline_mode<synchronous>, transform_indices = @transform_1, window_bounds = array<i64: 32, 96>}, {pipeline_mode = #tpu.pipeline_mode<synchronous>, transform_indices = @transform_2, window_bounds = array<i64: 1, 96>}, {transform_indices = @transform_3, window_bounds = array<i64: 1, 8, 32>}]} {
    %c0 = arith.constant 0 : index
    %c0_0 = arith.constant 0 : index
    %c0_1 = arith.constant 0 : index
    %0 = vector.load %arg1[%c0, %c0_0, %c0_1] : memref<1x8x32xbf16, #tpu.memory_space<vmem>>, vector<1x8x32xbf16>
    %1 = vector.shape_cast %0 : vector<1x8x32xbf16> to vector<8x32xbf16>
    %c0_2 = arith.constant 0 : index
    %c0_3 = arith.constant 0 : index
    %2 = vector.load %arg2[%c0_2, %c0_3] : memref<32x96xbf16, #tpu.memory_space<vmem>>, vector<32x96xbf16>
    %cst = arith.constant dense<0.000000e+00> : vector<8x96xf32>
    %3 = tpu.matmul %1, %2, %cst {dimension_numbers = #tpu.dot_dimension_numbers<[1], [0], [0], [1], [0, 0, 1, 1], [], []>} : vector<8x32xbf16>, vector<32x96xbf16>, vector<8x96xf32> -> vector<8x96xf32>
    %c0_4 = arith.constant 0 : index
    %c0_5 = arith.constant 0 : index
    %4 = vector.load %arg3[%c0_4, %c0_5] : memref<1x96xf32, #tpu.memory_space<vmem>>, vector<1x96xf32>
    %5 = vector.broadcast %4 : vector<1x96xf32> to vector<8x96xf32>
    %6 = arith.addf %3, %5 : vector<8x96xf32>
    %7 = vector.extract_strided_slice %6 {offsets = [0, 0], sizes = [8, 32], strides = [1, 1]} : vector<8x96xf32> to vector<8x32xf32>
    %8 = arith.truncf %7 : vector<8x32xf32> to vector<8x32xbf16>
    %9 = vector.extract_strided_slice %6 {offsets = [0, 32], sizes = [8, 32], strides = [1, 1]} : vector<8x96xf32> to vector<8x32xf32>
    %10 = arith.truncf %9 : vector<8x32xf32> to vector<8x32xbf16>
    %11 = vector.extract_strided_slice %6 {offsets = [0, 64], sizes = [8, 32], strides = [1, 1]} : vector<8x96xf32> to vector<8x32xf32>
    %12 = arith.truncf %11 : vector<8x32xf32> to vector<8x32xbf16>
    %cst_6 = arith.constant dense<0.000000e+00> : vector<8x8xf32>
    %13 = tpu.matmul %8, %10, %cst_6 {dimension_numbers = #tpu.dot_dimension_numbers<[1], [1], [0], [0], [0, 0, 1, 0], [], []>} : vector<8x32xbf16>, vector<8x32xbf16>, vector<8x8xf32> -> vector<8x8xf32>
    %cst_7 = arith.constant dense<0xFF800000> : vector<8xf32>
    %14 = vector.multi_reduction <maximumf>, %13, %cst_7 [1] : vector<8x8xf32> to vector<8xf32>
    %15 = vector.shape_cast %14 : vector<8xf32> to vector<8x1xf32>
    %16 = vector.broadcast %15 : vector<8x1xf32> to vector<8x8xf32>
    %17 = arith.subf %13, %16 : vector<8x8xf32>
    %18 = math.exp %17 : vector<8x8xf32>
    %cst_8 = arith.constant dense<0.000000e+00> : vector<8xf32>
    %19 = vector.multi_reduction <add>, %18, %cst_8 [1] : vector<8x8xf32> to vector<8xf32>
    %20 = vector.shape_cast %19 : vector<8xf32> to vector<8x1xf32>
    %21 = tpu.reciprocal %20 {approx = true} : vector<8x1xf32> -> vector<8x1xf32>
    %22 = vector.broadcast %21 : vector<8x1xf32> to vector<8x8xf32>
    %23 = arith.mulf %18, %22 : vector<8x8xf32>
    %24 = arith.truncf %23 : vector<8x8xf32> to vector<8x8xbf16>
    %cst_9 = arith.constant dense<0.000000e+00> : vector<8x32xf32>
    %25 = tpu.matmul %24, %12, %cst_9 {dimension_numbers = #tpu.dot_dimension_numbers<[1], [0], [0], [1], [0, 0, 1, 1], [], []>} : vector<8x8xbf16>, vector<8x32xbf16>, vector<8x32xf32> -> vector<8x32xf32>
    %c0_10 = arith.constant 0 : index
    %c0_11 = arith.constant 0 : index
    %c0_12 = arith.constant 0 : index
    %26 = vector.load %arg4[%c0_10, %c0_11, %c0_12] : memref<1x8x32xf32, #tpu.memory_space<vmem>>, vector<1x8x32xf32>
    %27 = vector.shape_cast %26 : vector<1x8x32xf32> to vector<8x32xf32>
    %28 = vector.shape_cast %25 : vector<8x32xf32> to vector<1x8x32xf32>
    tpu.vector_store %arg4[%c0_10, %c0_11, %c0_12], %28 {strides = array<i32>} : memref<1x8x32xf32, #tpu.memory_space<vmem>>, vector<1x8x32xf32>,
    return
  }
  func.func @transform_0(%arg0: i32) -> (i32, i32, i32) {
    %c0_i32 = arith.constant 0 : i32
    %c0_i32_0 = arith.constant 0 : i32
    %c0_i32_1 = arith.constant 0 : i32
    return %arg0, %c0_i32, %c0_i32_0 : i32, i32, i32
  }
  func.func @transform_1(%arg0: i32) -> (i32, i32) {
    %c0_i32 = arith.constant 0 : i32
    %c0_i32_0 = arith.constant 0 : i32
    %c0_i32_1 = arith.constant 0 : i32
    return %c0_i32, %c0_i32_0 : i32, i32
  }
  func.func @transform_2(%arg0: i32) -> (i32, i32) {
    %c0_i32 = arith.constant 0 : i32
    %c0_i32_0 = arith.constant 0 : i32
    %c0_i32_1 = arith.constant 0 : i32
    return %c0_i32, %c0_i32_0 : i32, i32
  }
  func.func @transform_3(%arg0: i32) -> (i32, i32, i32) {
    %c0_i32 = arith.constant 0 : i32
    %c0_i32_0 = arith.constant 0 : i32
    %c0_i32_1 = arith.constant 0 : i32
    return %arg0, %c0_i32, %c0_i32_0 : i32, i32, i32
  }
}

</mosaic_0001>

<llo_original>
// kernel: tpu_custom_call.1
$region0: #{tpu_custom_call.1}
  #allocation0 [shape = 'u32[]', space=smem, size = 0x4, offset = 0x4, fixed_abs, tag = 'smem constant byte address 0x4 - core index']
  #allocation1 [shape = 'u32[144,128]{1,0:T(1,128)}', space=vmem, size = 0x12000, scoped, tag = 'internal scratch']
  %s0 = inlined_call_operand.hbm [shape: bf16[2,8,32], index: 0, kind: input, shape index: {}]
  %s1 = inlined_call_operand.hbm [shape: bf16[32,96], index: 1, kind: input, shape index: {}]
  %s2 = inlined_call_operand.vmem [shape: f32[1,96], index: 2, kind: input, shape index: {}]
  %s3 = inlined_call_operand.hbm [shape: f32[2,8,32], index: 3, kind: output, shape index: {}]
  %s4 = sld [smem:[#allocation0]]
  $region53: #{tpu_custom_call.1} parent=0
    _
  %s6 = ssub.s32 1, %s4
  %s7 = scalar_select 0, %s6, %s4
  $region1: #{tpu_custom_call.1} parent=0
    #allocation2 [shape = 'u8[4096]{0}', space=vmem, size = 0x1000, scoped, tag = 'input window, operand 0']
    #allocation3 [shape = 's32[2]{0}', space=sflag, size = 0x8, scoped, tag = 'scoped memory for tpu_custom_call.1']
    #allocation4 [shape = 's32[2]{0}', space=sflag, size = 0x8, scoped, tag = 'scoped memory for tpu_custom_call.1']
    #allocation5 [shape = 'u8[8192]{0}', space=vmem, size = 0x2000, scoped, tag = 'input window, operand 1, single buffered']
    #allocation6 [shape = 's32[1]{0}', space=sflag, size = 0x4, scoped, tag = 'scoped memory for tpu_custom_call.1']
    #allocation7 [shape = 'u8[8192]{0}', space=vmem, size = 0x2000, scoped, tag = 'output window, operand 0']
    %8 = vsyncpa [#allocation3], 0
    %s9 = scalar_lea.sflag [#allocation3], 1
    %10 = vsyncpa %s9, 0
    %11 = vsyncpa [#allocation6], 0
    %12 = vsyncpa [#allocation4], 0
    %s13 = scalar_lea.sflag [#allocation4], 1
    %14 = vsyncpa %s13, 0
    loop: start=0, step=1, limit=4
    $region2: #{tpu_custom_call.1} parent=1 // loop_pre_header
      _
    $region3: #{tpu_custom_call.1} parent=1 // loop_header
      %s16 = sphi 0, %s20
      %p17 = scmp.ge.s32.totalorder %s16, 4
      %s26 = sphi 0, %s28
      %s29 = sphi 0, %s26
      %s30 = sphi 0, %s29
      %s46 = sphi 0, %s30
      %s50 = sphi 0, %s50
      %s52 = sphi 0, %s50
      %s53 = sphi 0, %s52
      %s67 = sphi 0, %s53
      %s71 = sphi 0, %s71
      %s73 = sphi 0, %s71
      %s74 = sphi 0, %s73
      %s88 = sphi 0, %s74
      %s94 = sphi 0, %s96
      %s97 = sphi 0, %s94
      %s98 = sphi 0, %s97
      %s114 = sphi 0, %s98
    $region4: #{tpu_custom_call.1} parent=1 // loop_header_branch
      %19 = sbr.rel (%p17) target = $region8
    $region5: #{tpu_custom_call.1} parent=1 // loop_body
      %s21 = ssub.s32 %s16, 1
      %s22 = ssub.s32 %s16, 2
      %s23 = sadd.s32 %s16, 1
      %s24 = ssub.s32 %s16, %s23
      %p25 = scmp.eq.s32.totalorder %s24, 0
      %s27 = sadd.s32 %s26, 1
      %s28 = scalar_select %p25, %s26, %s27
      %p31 = pneg %p25
      %p32 = scmp.eq.s32.totalorder %s16, 1
      %p33 = por %p31, %p32
      %p34 = scmp.ne.s32.totalorder %s26, %s29
      %p35 = scmp.eq.s32.totalorder %s16, 0
      %p36 = por %p34, %p35
      %p37 = scmp.ne.s32.totalorder %s26, %s29
      %p38 = scmp.eq.s32.totalorder %s21, 1
      %p39 = por %p37, %p38
      %p40 = scmp.ne.s32.totalorder %s29, %s30
      %p41 = scmp.eq.s32.totalorder %s21, 0
      %p42 = por %p40, %p41
      %p43 = scmp.ne.s32.totalorder %s29, %s30
      %p44 = scmp.eq.s32.totalorder %s22, 1
      %p45 = por %p43, %p44
      %p47 = scmp.ne.s32.totalorder %s30, %s46
      %p48 = scmp.eq.s32.totalorder %s22, 0
      %p49 = por %p47, %p48
      %s51 = sadd.s32 %s50, 1
      %p54 = scmp.eq.s32.totalorder %s16, 1
      %p55 = scmp.ne.s32.totalorder %s50, %s52
      %p56 = scmp.eq.s32.totalorder %s16, 0
      %p57 = por %p55, %p56
      %p58 = scmp.ne.s32.totalorder %s50, %s52
      %p59 = scmp.eq.s32.totalorder %s21, 1
      %p60 = por %p58, %p59
      %p61 = scmp.ne.s32.totalorder %s52, %s53
      %p62 = scmp.eq.s32.totalorder %s21, 0
      %p63 = por %p61, %p62
      %p64 = scmp.ne.s32.totalorder %s52, %s53
      %p65 = scmp.eq.s32.totalorder %s22, 1
      %p66 = por %p64, %p65
      %p68 = scmp.ne.s32.totalorder %s53, %s67
      %p69 = scmp.eq.s32.totalorder %s22, 0
      %p70 = por %p68, %p69
      %s72 = sadd.s32 %s71, 1
      %p75 = scmp.eq.s32.totalorder %s16, 1
      %p76 = scmp.ne.s32.totalorder %s71, %s73
      %p77 = scmp.eq.s32.totalorder %s16, 0
      %p78 = por %p76, %p77
      %p79 = scmp.ne.s32.totalorder %s71, %s73
      %p80 = scmp.eq.s32.totalorder %s21, 1
      %p81 = por %p79, %p80
      %p82 = scmp.ne.s32.totalorder %s73, %s74
      %p83 = scmp.eq.s32.totalorder %s21, 0
      %p84 = por %p82, %p83
      %p85 = scmp.ne.s32.totalorder %s73, %s74
      %p86 = scmp.eq.s32.totalorder %s22, 1
      %p87 = por %p85, %p86
      %p89 = scmp.ne.s32.totalorder %s74, %s88
      %p90 = scmp.eq.s32.totalorder %s22, 0
      %p91 = por %p89, %p90
      %s92 = ssub.s32 %s16, %s23
      %p93 = scmp.eq.s32.totalorder %s92, 0
      %s95 = sadd.s32 %s94, 1
      %s96 = scalar_select %p93, %s94, %s95
      %p99 = pneg %p93
      %p100 = scmp.eq.s32.totalorder %s16, 1
      %p101 = por %p99, %p100
      %p102 = scmp.ne.s32.totalorder %s94, %s97
      %p103 = scmp.eq.s32.totalorder %s16, 0
      %p104 = por %p102, %p103
      %p105 = scmp.ne.s32.totalorder %s94, %s97
      %p106 = scmp.eq.s32.totalorder %s21, 1
      %p107 = por %p105, %p106
      %p108 = scmp.ne.s32.totalorder %s97, %s98
      %p109 = scmp.eq.s32.totalorder %s21, 0
      %p110 = por %p108, %p109
      %p111 = scmp.ne.s32.totalorder %s97, %s98
      %p112 = scmp.eq.s32.totalorder %s22, 1
      %p113 = por %p111, %p112
      %p115 = scmp.ne.s32.totalorder %s98, %s114
      %p116 = scmp.eq.s32.totalorder %s22, 0
      %p117 = por %p115, %p116
      %p118 = scmp.le.s32.totalorder 1, %s16
      %p119 = scmp.lt.s32.totalorder %s16, 3
      %p120 = pnand %p118, %p119
      %p121 = pneg %p120
      // Predicated region
      $region9: #{tpu_custom_call.1} parent=5 // pred_check
        _
      $region10: #{tpu_custom_call.1} parent=5 // pred_check_branch
        %123 = sbr.rel (%p120) target = $region12
      $region11: #{tpu_custom_call.1} parent=5 // pred_region
        %s124 = ssub.s32 %s16, 1
        // Predicated region
        $region13: #{tpu_custom_call.1} parent=11 // pred_check
          %p125 = pneg %p63
        $region14: #{tpu_custom_call.1} parent=11 // pred_check_branch
          %127 = sbr.rel (%p125) target = $region16
        $region15: #{tpu_custom_call.1} parent=11 // pred_region
          %s129 = ssub.s32 256, 256
          %130 = vsyncadd [#allocation6], %s129
          %s131 = sshll.u32 [#allocation5], 4
          %s132 = int_to_ptr.vmem [resolvable:$true] %s131
          %137 = dma.hbm_to_vmem [thread:$0]  %s1, 256, %s132, [#allocation6], 64, 64, 4
        $region16: #{tpu_custom_call.1} parent=11 // pred_fallthru
          _
        // Predicated region
        $region17: #{tpu_custom_call.1} parent=11 // pred_check
          %p138 = pneg %p84
        $region18: #{tpu_custom_call.1} parent=11 // pred_check_branch
          %140 = sbr.rel (%p138) target = $region20
        $region19: #{tpu_custom_call.1} parent=11 // pred_region
          _
        $region20: #{tpu_custom_call.1} parent=11 // pred_fallthru
          _
      $region12: #{tpu_custom_call.1} parent=5 // pred_fallthru
        _
      %p141 = scmp.lt.s32.totalorder %s16, 2
      // Predicated region
      $region21: #{tpu_custom_call.1} parent=5 // pred_check
        %p142 = pneg %p141
      $region22: #{tpu_custom_call.1} parent=5 // pred_check_branch
        %144 = sbr.rel (%p142) target = $region24
      $region23: #{tpu_custom_call.1} parent=5 // pred_region
        // Predicated region
        $region25: #{tpu_custom_call.1} parent=23 // pred_check
          %p145 = pneg %p36
        $region26: #{tpu_custom_call.1} parent=23 // pred_check_branch
          %147 = sbr.rel (%p145) target = $region28
        $region27: #{tpu_custom_call.1} parent=23 // pred_region
          %s148 = sand.u32 %s26, 1
          %s149 = scalar_lea.sflag [#allocation3], %s148
          %s150 = sand.u32 %s26, 1
          %s151 = smul.addr %s150, 4
          %s152 = scalar_lea.vmem [#allocation2], %s151
          %s154 = ssub.s32 64, 64
          %155 = vsyncadd %s149, %s154
          %s156 = smul.addr %s16, 64
          %s157 = scalar_lea.hbm %s0, %s156
          %s159 = sshll.u32 %s152, 4
          %s160 = int_to_ptr.vmem [resolvable:$true] %s159
          %162 = dma.hbm_to_vmem [thread:$0]  %s157, 64, %s160, %s149
        $region28: #{tpu_custom_call.1} parent=23 // pred_fallthru
          _
      $region24: #{tpu_custom_call.1} parent=5 // pred_fallthru
        _
      %p163 = scmp.le.s32.totalorder 1, %s16
      %p164 = scmp.lt.s32.totalorder %s16, 3
      %p165 = pnand %p163, %p164
      %p166 = pneg %p165
      // Predicated region
      $region29: #{tpu_custom_call.1} parent=5 // pred_check
        _
      $region30: #{tpu_custom_call.1} parent=5 // pred_check_branch
        %168 = sbr.rel (%p165) target = $region32
      $region31: #{tpu_custom_call.1} parent=5 // pred_region
        %s169 = ssub.s32 %s16, 1
        %s170 = sand.u32 %s29, 1
        %s171 = scalar_lea.sflag [#allocation3], %s170
        %s172 = sand.u32 %s29, 1
        %s173 = smul.addr %s172, 4
        %s174 = scalar_lea.vmem [#allocation2], %s173
        // Predicated region
        $region33: #{tpu_custom_call.1} parent=31 // pred_check
          %p175 = pneg %p42
        $region34: #{tpu_custom_call.1} parent=31 // pred_check_branch
          %177 = sbr.rel (%p175) target = $region36
        $region35: #{tpu_custom_call.1} parent=31 // pred_region
          %178 = dma.done %s171, 64
        $region36: #{tpu_custom_call.1} parent=31 // pred_fallthru
          _
        // Predicated region
        $region37: #{tpu_custom_call.1} parent=31 // pred_check
          %p179 = pneg %p63
        $region38: #{tpu_custom_call.1} parent=31 // pred_check_branch
          %181 = sbr.rel (%p179) target = $region40
        $region39: #{tpu_custom_call.1} parent=31 // pred_region
          %182 = dma.done [#allocation6], 256
        $region40: #{tpu_custom_call.1} parent=31 // pred_fallthru
          _
        %s183 = sand.u32 %s29, 1
        %s184 = scalar_lea.sflag [#allocation3], %s183
        %s185 = sand.u32 %s29, 1
        %s186 = smul.addr %s185, 4
        %s187 = scalar_lea.vmem [#allocation2], %s186
        %p188 = pneg %p42
        %p189 = pneg %p39
        %p190 = pneg %p63
        %p191 = pneg %p60
        %p192 = pneg %p84
        %p193 = pneg %p81
        %p194 = pneg %p110
        %p195 = pneg %p107
        %s196 = sand.u32 %s97, 1
        %s197 = scalar_lea.sflag [#allocation4], %s196
        %s198 = sand.u32 %s97, 1
        %s199 = smul.addr %s198, 8
        %s200 = scalar_lea.vmem [#allocation7], %s199
        %v202 = vld [vmem:[%s174] sm:$0xf]
        %v203 = vld [vmem:[#allocation5] sm:$0xf]
        %v204 = vld [vmem:[#allocation5 + $0x4] sm:$0xf]
        %v205 = vld [vmem:[#allocation5 + $0x8] sm:$0xf]
        %v206 = vld [vmem:[#allocation5 + $0xc] sm:$0xf]
        %v207 = vld [vmem:[%s2] sm:$0x1]
        %v209 = vlaneseq
        %v210 = vshrl.u32 %v209, 7
        %v211 = vsub.s32 0, %v210
        %v212 = vrot.slane %v207, %v211
        %v218 = vunpack.c.l.b16 %v203
        %v219 = vunpack.c.l.b16 %v204
        %v220 = vunpack.c.l.b16 %v205
        %v221 = vunpack.c.l.b16 %v206
        %v222 = vpack.c.b16 %v219, %v218
        %v223 = vpack.c.b16 %v221, %v220
        %vm226 = vcmask 261120
        %v228 = vsel %vm226, %v202, 0
        %230 = vmatprep.subr.bf16.mxu0 0
        %231 = vmatpush1.bf16.msra.mxu0 0
        %232 = vmatprep.subr.bf16.mxu0 0
        %233 = vmatpush1.bf16.msra.mxu0 0
        %234 = vmatprep.subr.bf16.mxu0 0
        %235 = vmatpush1.bf16.msra.mxu0 0
        %236 = vmatprep.subr.bf16.mxu0 0
        %237 = vmatpush1.bf16.msra.mxu0 0
        %238 = vmatprep.subr.bf16.mxu0 0
        %239 = vmatpush1.bf16.msra.mxu0 0
        %240 = vmatprep.subr.bf16.mxu0 0
        %241 = vmatpush1.bf16.msra.mxu0 0
        %242 = vmatprep.subr.bf16.mxu0 0
        %243 = vmatpush1.bf16.msra.mxu0 %v223
        %244 = vmatprep.subr.bf16.mxu0 0
        %245 = vmatpush1.bf16.msra.mxu0 %v222
        %246 = vmatprep.subr.bf16.mxu0 0
        %247 = vmatpush2.bf16.msra.mxu0 0
        %248 = vmatprep.subr.bf16.mxu0 0
        %249 = vmatpush2.bf16.msra.mxu0 0
        %250 = vmatprep.subr.bf16.mxu0 0
        %251 = vmatpush2.bf16.msra.mxu0 0
        %252 = vmatprep.subr.bf16.mxu0 0
        %253 = vmatpush2.bf16.msra.mxu0 0
        %254 = vmatprep.subr.bf16.mxu0 0
        %255 = vmatpush2.bf16.msra.mxu0 0
        %256 = vmatprep.subr.bf16.mxu0 0
        %257 = vmatpush2.bf16.msra.mxu0 0
        %258 = vmatprep.subr.bf16.mxu0 0
        %259 = vmatpush2.bf16.msra.mxu0 0
        %260 = vmatprep.subr.bf16.mxu0 0
        %261 = vmatpush2.bf16.msra.mxu0 0
        %262 = vmatprep.mubr.bf16.mxu0 0
        %263 = vmatmul.mubr.bf16.gmra.mxu0 %v228
        %v264 = vpop.f32.mrf.mxu0
        %v265 = vadd.f32 %v212, %v264
        %v266 = vpop.f32.mrf.mxu0
        %v267 = vpop.f32.mrf.mxu0
        %v268 = vpop.f32.mrf.mxu0
        %269 = vdwg.mxu0
        %v270 = vpack.c.bf16 %v265, %v265
        %272 = vrot.lane.b32.xlu0 %v270, 96
        %v273 = vpop.permute.xlu0 %272
        %v275 = vsel %vm226, %v270, 0
        %v278 = vsel %vm226, %v273, 0
        %280 = vmatprep.subr.bf16.mxu0 0
        %281 = vmatpush1.bf16.xpose.msra.mxu0 0
        %282 = vmatprep.subr.bf16.mxu0 0
        %283 = vmatpush1.bf16.xpose.msra.mxu0 0
        %284 = vmatprep.subr.bf16.mxu0 0
        %285 = vmatpush1.bf16.xpose.msra.mxu0 0
        %286 = vmatprep.subr.bf16.mxu0 0
        %287 = vmatpush1.bf16.xpose.msra.mxu0 0
        %288 = vmatprep.subr.bf16.mxu0 0
        %289 = vmatpush1.bf16.xpose.msra.mxu0 0
        %290 = vmatprep.subr.bf16.mxu0 0
        %291 = vmatpush1.bf16.xpose.msra.mxu0 0
        %292 = vmatprep.subr.bf16.mxu0 0
        %293 = vmatpush1.bf16.xpose.msra.mxu0 0
        %294 = vmatprep.subr.bf16.mxu0 0
        %295 = vmatpush1.bf16.xpose.msra.mxu0 %v278
        %296 = vmatprep.subr.bf16.mxu0 0
        %297 = vmatpush2.bf16.xpose.msra.mxu0 0
        %298 = vmatprep.subr.bf16.mxu0 0
        %299 = vmatpush2.bf16.xpose.msra.mxu0 0
        %300 = vmatprep.subr.bf16.mxu0 0
        %301 = vmatpush2.bf16.xpose.msra.mxu0 0
        %302 = vmatprep.subr.bf16.mxu0 0
        %303 = vmatpush2.bf16.xpose.msra.mxu0 0
        %304 = vmatprep.subr.bf16.mxu0 0
        %305 = vmatpush2.bf16.xpose.msra.mxu0 0
        %306 = vmatprep.subr.bf16.mxu0 0
        %307 = vmatpush2.bf16.xpose.msra.mxu0 0
        %308 = vmatprep.subr.bf16.mxu0 0
        %309 = vmatpush2.bf16.xpose.msra.mxu0 0
        %310 = vmatprep.subr.bf16.mxu0 0
        %311 = vmatpush2.bf16.xpose.msra.mxu0 0
        %312 = vmatprep.mubr.bf16.mxu0 0
        %313 = vmatmul.mubr.bf16.gmra.mxu0 %v275
        %v314 = vpop.f32.mrf.mxu0
        %v315 = vadd.f32 0.0, %v314
        %v316 = vpop.f32.mrf.mxu0
        %v317 = vpop.f32.mrf.mxu0
        %v318 = vpop.f32.mrf.mxu0
        %319 = vdwg.mxu0
        %vm320 = vcmask 64512
        %v321 = vsel %vm320, %v315, -inf
        %322 = vmax.xlane.f32.xlu0 %v321
        %v323 = vpop.xlane.xlu0 %322
        %v324 = vsub.f32 %v315, %v323
        %v325 = vmul.f32 %v324, 1.442695
        %v326 = vpow.pop %v325
        %v327 = vsel %vm320, %v326, 0.0
        %328 = vadd.xlane.f32.xlu0 %v327
        %v329 = vpop.xlane.xlu0 %328
        %v330 = vrcp.pop %v329
        %v331 = vmul.f32 %v326, %v330
        %v332 = vpack.c.bf16 %v331, %v331
        %333 = vrot.lane.b32.xlu0 %v270, 64
        %v334 = vpop.permute.xlu0 %333
        %v336 = vsel %vm320, %v332, 0
        %vm338 = vcmask 1043456
        %v340 = vsel %vm338, %v334, 0
        %342 = vmatprep.subr.bf16.mxu0 0
        %343 = vmatpush1.bf16.msra.mxu0 0
        %344 = vmatprep.subr.bf16.mxu0 0
        %345 = vmatpush1.bf16.msra.mxu0 0
        %346 = vmatprep.subr.bf16.mxu0 0
        %347 = vmatpush1.bf16.msra.mxu0 0
        %348 = vmatprep.subr.bf16.mxu0 0
        %349 = vmatpush1.bf16.msra.mxu0 0
        %350 = vmatprep.subr.bf16.mxu0 0
        %351 = vmatpush1.bf16.msra.mxu0 0
        %352 = vmatprep.subr.bf16.mxu0 0
        %353 = vmatpush1.bf16.msra.mxu0 0
        %354 = vmatprep.subr.bf16.mxu0 0
        %355 = vmatpush1.bf16.msra.mxu0 0
        %356 = vmatprep.subr.bf16.mxu0 0
        %357 = vmatpush1.bf16.msra.mxu0 %v340
        %358 = vmatprep.subr.bf16.mxu0 0
        %359 = vmatpush2.bf16.msra.mxu0 0
        %360 = vmatprep.subr.bf16.mxu0 0
        %361 = vmatpush2.bf16.msra.mxu0 0
        %362 = vmatprep.subr.bf16.mxu0 0
        %363 = vmatpush2.bf16.msra.mxu0 0
        %364 = vmatprep.subr.bf16.mxu0 0
        %365 = vmatpush2.bf16.msra.mxu0 0
        %366 = vmatprep.subr.bf16.mxu0 0
        %367 = vmatpush2.bf16.msra.mxu0 0
        %368 = vmatprep.subr.bf16.mxu0 0
        %369 = vmatpush2.bf16.msra.mxu0 0
        %370 = vmatprep.subr.bf16.mxu0 0
        %371 = vmatpush2.bf16.msra.mxu0 0
        %372 = vmatprep.subr.bf16.mxu0 0
        %373 = vmatpush2.bf16.msra.mxu0 0
        %374 = vmatprep.mubr.bf16.mxu0 0
        %375 = vmatmul.mubr.bf16.gmra.mxu0 %v336
        %v376 = vpop.f32.mrf.mxu0
        %v377 = vadd.f32 0.0, %v376
        %v378 = vpop.f32.mrf.mxu0
        %v379 = vpop.f32.mrf.mxu0
        %v380 = vpop.f32.mrf.mxu0
        %381 = vdwg.mxu0
        %382 = vst.msk [vmem:[%s200] sm:$0xff] %vm226, %v377
        %s383 = sand.u32 %s97, 1
        %s384 = scalar_lea.sflag [#allocation4], %s383
        %s385 = sand.u32 %s97, 1
        %s386 = smul.addr %s385, 8
        %s387 = scalar_lea.vmem [#allocation7], %s386
        // Predicated region
        $region41: #{tpu_custom_call.1} parent=31 // pred_check
          %p388 = pneg %p107
        $region42: #{tpu_custom_call.1} parent=31 // pred_check_branch
          %390 = sbr.rel (%p388) target = $region44
        $region43: #{tpu_custom_call.1} parent=31 // pred_region
          %s392 = ssub.s32 128, 128
          %393 = vsyncadd %s384, %s392
          %s394 = smul.addr %s21, 128
          %s395 = scalar_lea.hbm %s3, %s394
          %s397 = sshll.u32 %s387, 4
          %s398 = int_to_ptr.vmem [resolvable:$true] %s397
          %400 = dma.vmem_to_hbm [thread:$0]  %s398, 128, %s395, %s384
        $region44: #{tpu_custom_call.1} parent=31 // pred_fallthru
          _
      $region32: #{tpu_custom_call.1} parent=5 // pred_fallthru
        _
      %p401 = scmp.le.s32.totalorder 2, %s16
      // Predicated region
      $region45: #{tpu_custom_call.1} parent=5 // pred_check
        %p402 = pneg %p401
      $region46: #{tpu_custom_call.1} parent=5 // pred_check_branch
        %404 = sbr.rel (%p402) target = $region48
      $region47: #{tpu_custom_call.1} parent=5 // pred_region
        %s405 = ssub.s32 %s16, 2
        // Predicated region
        $region49: #{tpu_custom_call.1} parent=47 // pred_check
          %p406 = pneg %p113
        $region50: #{tpu_custom_call.1} parent=47 // pred_check_branch
          %408 = sbr.rel (%p406) target = $region52
        $region51: #{tpu_custom_call.1} parent=47 // pred_region
          %s409 = sand.u32 %s98, 1
          %s410 = scalar_lea.sflag [#allocation4], %s409
          %s411 = sand.u32 %s98, 1
          %s412 = smul.addr %s411, 8
          %s413 = scalar_lea.vmem [#allocation7], %s412
          %414 = dma.done %s410, 128
        $region52: #{tpu_custom_call.1} parent=47 // pred_fallthru
          _
      $region48: #{tpu_custom_call.1} parent=5 // pred_fallthru
        _
    $region6: #{tpu_custom_call.1} parent=1 // loop_footer
      %s20 = sadd.s32 1, %s16
    $region7: #{tpu_custom_call.1} parent=1 // loop_footer_branch
      %15 = sbr.rel target = $region3
    $region8: #{tpu_custom_call.1} parent=1 // loop_exit
      _
    %415 = vsyncpa [#allocation3], 1
    %s416 = scalar_lea.sflag [#allocation3], 1
    %417 = vsyncpa %s416, 1
    %418 = vsyncpa [#allocation6], 1
    %419 = vsyncpa [#allocation4], 1
    %s420 = scalar_lea.sflag [#allocation4], 1
    %421 = vsyncpa %s420, 1

</llo_original>
